<compile_context>
chip_gen: v7x
topology: tpu7x:2x2x1
jax: 0.10.0
libtpu: 0.0.40
codegen_flags: <defaults>
</compile_context>

<pallas_src>
import math
from functools import partial

import jax
import jax.numpy as jnp
from jax.experimental import pallas as pl
from jax.experimental.pallas import tpu as pltpu

LANES = 128


def _round_up(x, m):
    return (x + m - 1) // m * m


# ---------------------------------------------------------------------------
# Fused Pallas kernel: all GIN layers + folded sum over the sample axis
# ---------------------------------------------------------------------------

def make_gin_pe_kernel(n_layers, k_total):
    """Node features live as [K, N, Dp] f32 in VMEM.
       K  = sample/neighbor axis (pure batch axis through every layer -> grid axis)
       N  = node axis            (mixed only by the aggregation matmul)
       Dp = feature axis, zero-padded to a multiple of 128 lanes."""

    def kernel(coef_ref, adj_ref, *rest):
        x_ref, pe_ref = rest[-2], rest[-1]
        wrefs = rest[:-2]
        kq = pl.program_id(0)

        tk, n, _ = x_ref.shape
        x = x_ref[...]                                           # f32 [tk, n, Dp]
        # adj_t broadcast over the sample tile once, reused by every layer.
        adj_b = jnp.broadcast_to(adj_ref[...], (tk, n, n))       # bf16 [tk, n, n]

        for l in range(n_layers):
            w1, b1, w2, b2 = wrefs[4 * l: 4 * l + 4]
            # S[k,i,:] = sum_j adj_t[i,j] * X[k,j,:]  (dense scatter-add; bf16 MXU, f32 acc)
            s = jnp.einsum('kij,kjd->kid', adj_b, x.astype(jnp.bfloat16),
                           preferred_element_type=jnp.float32)
            z = coef_ref[l] * x + s                              # f32 on the VPU

            # MLP over the feature dim with the real (small) weights: merging the two
            # leading dims keeps the 128-aligned minor dim -> free reshape, 2-D matmuls.
            d_in = z.shape[-1]
            z2 = z.reshape(tk * n, d_in)
            h2 = jnp.dot(z2.astype(jnp.bfloat16), w1[...],
                         preferred_element_type=jnp.float32) + b1[...]
            h2 = jnp.maximum(h2, 0.0)

            if l + 1 < n_layers:
                y2 = jnp.dot(h2.astype(jnp.bfloat16), w2[...],
                             preferred_element_type=jnp.float32) + b2[...]
                x = y2.reshape(tk, n, y2.shape[-1])
            else:
                # PE = X.sum(dim=1) commutes with the (purely linear) last layer:
                # reduce over the sample axis BEFORE the final matmul.
                h3 = h2.reshape(tk, n, h2.shape[-1])
                g = jnp.sum(h3, axis=0)                          # f32 [n, Hp]
                part = jnp.dot(g.astype(jnp.bfloat16), w2[...],
                               preferred_element_type=jnp.float32)

                @pl.when(kq == 0)
                def _():
                    pe_ref[...] = jnp.broadcast_to(
                        jnp.float32(k_total) * b2[...], pe_ref.shape)

                pe_ref[...] += part

    return kernel


# ---------------------------------------------------------------------------
# Wrapper: padding / bf16 packing + single pallas_call
# ---------------------------------------------------------------------------

def _pack_params(params):
    """Zero-pad weights/biases to 128-lane multiples; cast matmul weights to bf16."""
    coef = jnp.concatenate([(1.0 + eps).astype(jnp.float32) for (eps, *_) in params])
    packed, dims = [], []
    for (eps, w1, b1, w2, b2) in params:
        d_in, d_h = w1.shape
        d_out = w2.shape[1]
        dp, hp, op = (_round_up(d, LANES) for d in (d_in, d_h, d_out))
        w1p = jnp.zeros((dp, hp), jnp.bfloat16).at[:d_in, :d_h].set(w1.astype(jnp.bfloat16))
        b1p = jnp.zeros((1, hp), jnp.float32).at[:, :d_h].set(b1)
        w2p = jnp.zeros((hp, op), jnp.bfloat16).at[:d_h, :d_out].set(w2.astype(jnp.bfloat16))
        b2p = jnp.zeros((1, op), jnp.float32).at[:, :d_out].set(b2)
        packed += [w1p, b1p, w2p, b2p]
        dims.append((dp, hp, op))
    return coef, packed, dims


@partial(jax.jit, static_argnames=("tk",))
def gin_sample_aggregator_forward(W, adj_t, params, *, tk=4):
    """W: [N, K(=N), M] node features; adj_t: dense [N, N] transposed adjacency."""
    N, K, M = W.shape
    n_layers = len(params)
    out_dims = params[-1][3].shape[1]

    coef, packed, dims = _pack_params(params)
    dp0 = dims[0][0]
    op_last = dims[-1][2]

    # [N, K, M] -> [K, N, Mp]: sample axis leading (clean batch axis for both the
    # aggregation and the MLP), feature dim zero-padded to a lane multiple.
    x0 = jnp.zeros((K, N, dp0), jnp.float32).at[:, :, :M].set(jnp.transpose(W, (1, 0, 2)))
    adj_bf16 = adj_t.astype(jnp.bfloat16)        # edge counts: exact in bf16

    tk = min(tk, K)
    assert K % tk == 0, "sample axis must be divisible by the tile size"
    grid = (K // tk,)

    # Honest cost estimate (real padded dims, no kron inflation).
    flops = 0
    for l, (dp, hp, op) in enumerate(dims):
        flops += 2 * K * N * N * dp                                  # aggregation
        flops += 2 * K * N * dp * hp                                 # MLP linear 1
        flops += 2 * (K if l + 1 < n_layers else 1) * N * hp * op    # MLP linear 2 (folded last)
    bytes_accessed = (4 * coef.size + 2 * adj_bf16.size + 4 * x0.size
                      + sum(int(a.size) * a.dtype.itemsize for a in packed)
                      + 4 * N * op_last)

    def full_spec(a):
        nd = a.ndim
        return pl.BlockSpec(a.shape, lambda k, *_: (0,) * nd)        # resident across grid

    grid_spec = pltpu.PrefetchScalarGridSpec(
        num_scalar_prefetch=1,                                       # coef -> SMEM
        grid=grid,
        in_specs=([full_spec(adj_bf16)]
                  + [full_spec(a) for a in packed]
                  + [pl.BlockSpec((tk, N, dp0), lambda k, *_: (k, 0, 0))]),
        out_specs=pl.BlockSpec((N, op_last), lambda k, *_: (0, 0)),  # accumulator block
    )

    pe_pad = pl.pallas_call(
        make_gin_pe_kernel(n_layers, K),
        out_shape=jax.ShapeDtypeStruct((N, op_last), jnp.float32),
        grid_spec=grid_spec,
        compiler_params=pltpu.CompilerParams(
            dimension_semantics=("arbitrary",),          # output accumulates over sample tiles
            vmem_limit_bytes=32 * 1024 * 1024),
        cost_estimate=pl.CostEstimate(flops=int(flops), transcendentals=0,
                                      bytes_accessed=int(bytes_accessed)),
    )(coef, adj_bf16, *packed, x0)

    return pe_pad[:, :out_dims]                          # lane-dense store, slice on host


# ---------------------------------------------------------------------------
# Parameters + pure-JAX (f32) reference
# ---------------------------------------------------------------------------

def make_layer_params(key, d_in, d_out):
    ke, k1, k2, k3, k4 = jax.random.split(key, 5)
    eps = jax.random.normal(ke, (1,), jnp.float32)               # nn.Parameter(torch.randn(1))
    w1 = jax.random.normal(k1, (d_in, d_out), jnp.float32) / math.sqrt(d_in)
    b1 = jax.random.normal(k2, (1, d_out), jnp.float32) * 0.01
    w2 = jax.random.normal(k3, (d_out, d_out), jnp.float32) / math.sqrt(d_out)
    b2 = jax.random.normal(k4, (1, d_out), jnp.float32) * 0.01
    return (eps, w1, b1, w2, b2)


def reference_forward(W, adj_t, params):
    X = W
    for (eps, w1, b1, w2, b2) in params:
        S = jnp.einsum('ij,jkd->ikd', adj_t, X)
        Z = (1.0 + eps[0]) * X + S
        H = jnp.maximum(jnp.einsum('nkd,de->nke', Z, w1) + b1[0], 0.0)
        X = jnp.einsum('nke,ef->nkf', H, w2) + b2[0]
    return X.sum(axis=1)


# ---------------------------------------------------------------------------
# Driver
# ---------------------------------------------------------------------------

if __name__ == "__main__":
    N = 8          # nodes (single graph; W_list has one element -> cat is identity)
    M = 4          # in_dims (number of spectral filters psi_l)
    HIDDEN = 16
    OUT = 8
    N_LAYERS = 2

    key = jax.random.PRNGKey(0)
    kW, kp0, kp1 = jax.random.split(key, 3)

    # W_list = [ [N, N, M] ]  -> W = cat(W_list, dim=0)
    W = jax.random.normal(kW, (N, N, M), jnp.float32)

    # edge_index: bidirectional ring graph, COO [2, E]
    src = jnp.concatenate([jnp.arange(N), jnp.arange(N)])
    dst = jnp.concatenate([(jnp.arange(N) + 1) % N, (jnp.arange(N) - 1) % N])
    A = jnp.zeros((N, N), jnp.float32).at[src, dst].add(1.0)     # A[s, d] = #edges s->d
    adj_t = A.T                                                  # aggregation S = A^T @ X

    params = [
        make_layer_params(kp0, M, HIDDEN),      # GINLayer 0: mlp(in_dims, hidden_dims)
        make_layer_params(kp1, HIDDEN, OUT),    # GINLayer 1: mlp(hidden_dims, out_dims)
    ]

    pe = gin_sample_aggregator_forward(W, adj_t, params)
    pe = jax.block_until_ready(pe)

    ref = reference_forward(W, adj_t, params)
    assert pe.shape == (N, OUT), pe.shape
    # bf16 MXU operands (f32 accumulation) -> tolerance relative to output scale.
    err = float(jnp.max(jnp.abs(pe - ref)))
    scale = float(jnp.max(jnp.abs(ref)))
    assert err <= 2.5e-2 * max(scale, 1.0), (err, scale)

    print("KERNEL_OK")
</pallas_src>

<mosaic_0001>
module attributes {stable_mosaic.version = 11 : i64} {
  func.func @kernel(%arg0: i32, %arg1: memref<2xf32, #tpu.memory_space<smem>>, %arg2: memref<8x8xbf16, #tpu.memory_space<vmem>>, %arg3: memref<128x128xbf16, #tpu.memory_space<vmem>>, %arg4: memref<1x128xf32, #tpu.memory_space<vmem>>, %arg5: memref<128x128xbf16, #tpu.memory_space<vmem>>, %arg6: memref<1x128xf32, #tpu.memory_space<vmem>>, %arg7: memref<128x128xbf16, #tpu.memory_space<vmem>>, %arg8: memref<1x128xf32, #tpu.memory_space<vmem>>, %arg9: memref<128x128xbf16, #tpu.memory_space<vmem>>, %arg10: memref<1x128xf32, #tpu.memory_space<vmem>>, %arg11: memref<4x8x128xf32, #tpu.memory_space<vmem>>, %arg12: memref<8x128xf32, #tpu.memory_space<vmem>>) attributes {dimension_semantics = [#tpu.dimension_semantics<arbitrary>], iteration_bounds = array<i64: 2>, scalar_prefetch = 1 : i64, scratch_operands = 0 : i64, tpu.core_type = #tpu.core_type<tc>, window_params = [{pipeline_mode = #tpu.pipeline_mode<synchronous>, transform_indices = @transform_0, window_bounds = array<i64: 8, 8>}, {pipeline_mode = #tpu.pipeline_mode<synchronous>, transform_indices = @transform_1, window_bounds = array<i64: 128, 128>}, {pipeline_mode = #tpu.pipeline_mode<synchronous>, transform_indices = @transform_2, window_bounds = array<i64: 1, 128>}, {pipeline_mode = #tpu.pipeline_mode<synchronous>, transform_indices = @transform_3, window_bounds = array<i64: 128, 128>}, {pipeline_mode = #tpu.pipeline_mode<synchronous>, transform_indices = @transform_4, window_bounds = array<i64: 1, 128>}, {pipeline_mode = #tpu.pipeline_mode<synchronous>, transform_indices = @transform_5, window_bounds = array<i64: 128, 128>}, {pipeline_mode = #tpu.pipeline_mode<synchronous>, transform_indices = @transform_6, window_bounds = array<i64: 1, 128>}, {pipeline_mode = #tpu.pipeline_mode<synchronous>, transform_indices = @transform_7, window_bounds = array<i64: 128, 128>}, {pipeline_mode = #tpu.pipeline_mode<synchronous>, transform_indices = @transform_8, window_bounds = array<i64: 1, 128>}, {transform_indices = @transform_9, window_bounds = array<i64: 4, 8, 128>}, {pipeline_mode = #tpu.pipeline_mode<synchronous>, transform_indices = @transform_10, window_bounds = array<i64: 8, 128>}]} {
    %c0 = arith.constant 0 : index
    %c0_0 = arith.constant 0 : index
    %c0_1 = arith.constant 0 : index
    %0 = vector.load %arg11[%c0, %c0_0, %c0_1] : memref<4x8x128xf32, #tpu.memory_space<vmem>>, vector<4x8x128xf32>
    %c0_2 = arith.constant 0 : index
    %c0_3 = arith.constant 0 : index
    %1 = vector.load %arg2[%c0_2, %c0_3] : memref<8x8xbf16, #tpu.memory_space<vmem>>, vector<8x8xbf16>
    %2 = vector.shape_cast %1 : vector<8x8xbf16> to vector<1x8x8xbf16>
    %3 = vector.broadcast %2 : vector<1x8x8xbf16> to vector<4x8x8xbf16>
    %4 = arith.truncf %0 : vector<4x8x128xf32> to vector<4x8x128xbf16>
    "tpu.trace_start"() <{level = 10 : i32, message = "kij,kjd->kid"}> : () -> ()
    %cst = arith.constant dense<0.000000e+00> : vector<4x8x128xf32>
    %5 = tpu.matmul %3, %4, %cst {dimension_numbers = #tpu.dot_dimension_numbers<[2], [1], [1], [2], [0, 0, 0, 1, 1, 2], [0], [0]>} : vector<4x8x8xbf16>, vector<4x8x128xbf16>, vector<4x8x128xf32> -> vector<4x8x128xf32>
    "tpu.trace_stop"() : () -> ()
    %c0_4 = arith.constant 0 : index
    %6 = memref.load %arg1[%c0_4] : memref<2xf32, #tpu.memory_space<smem>>
    %7 = vector.broadcast %6 : f32 to vector<4x8x128xf32>
    %8 = arith.mulf %7, %0 : vector<4x8x128xf32>
    %9 = arith.addf %8, %5 : vector<4x8x128xf32>
    %10 = vector.shape_cast %9 : vector<4x8x128xf32> to vector<32x128xf32>
    %11 = arith.truncf %10 : vector<32x128xf32> to vector<32x128xbf16>
    %c0_5 = arith.constant 0 : index
    %c0_6 = arith.constant 0 : index
    %12 = vector.load %arg3[%c0_5, %c0_6] : memref<128x128xbf16, #tpu.memory_space<vmem>>, vector<128x128xbf16>
    %cst_7 = arith.constant dense<0.000000e+00> : vector<32x128xf32>
    %13 = tpu.matmul %11, %12, %cst_7 {dimension_numbers = #tpu.dot_dimension_numbers<[1], [0], [0], [1], [0, 0, 1, 1], [], []>} : vector<32x128xbf16>, vector<128x128xbf16>, vector<32x128xf32> -> vector<32x128xf32>
    %c0_8 = arith.constant 0 : index
    %c0_9 = arith.constant 0 : index
    %14 = vector.load %arg4[%c0_8, %c0_9] : memref<1x128xf32, #tpu.memory_space<vmem>>, vector<1x128xf32>
    %15 = vector.broadcast %14 : vector<1x128xf32> to vector<32x128xf32>
    %16 = arith.addf %13, %15 : vector<32x128xf32>
    %cst_10 = arith.constant 0.000000e+00 : f32
    %17 = vector.broadcast %cst_10 : f32 to vector<32x128xf32>
    %18 = arith.maximumf %16, %17 : vector<32x128xf32>
    %19 = arith.truncf %18 : vector<32x128xf32> to vector<32x128xbf16>
    %c0_11 = arith.constant 0 : index
    %c0_12 = arith.constant 0 : index
    %20 = vector.load %arg5[%c0_11, %c0_12] : memref<128x128xbf16, #tpu.memory_space<vmem>>, vector<128x128xbf16>
    %cst_13 = arith.constant dense<0.000000e+00> : vector<32x128xf32>
    %21 = tpu.matmul %19, %20, %cst_13 {dimension_numbers = #tpu.dot_dimension_numbers<[1], [0], [0], [1], [0, 0, 1, 1], [], []>} : vector<32x128xbf16>, vector<128x128xbf16>, vector<32x128xf32> -> vector<32x128xf32>
    %c0_14 = arith.constant 0 : index
    %c0_15 = arith.constant 0 : index
    %22 = vector.load %arg6[%c0_14, %c0_15] : memref<1x128xf32, #tpu.memory_space<vmem>>, vector<1x128xf32>
    %23 = vector.broadcast %22 : vector<1x128xf32> to vector<32x128xf32>
    %24 = arith.addf %21, %23 : vector<32x128xf32>
    %25 = vector.shape_cast %24 : vector<32x128xf32> to vector<4x8x128xf32>
    %26 = arith.truncf %25 : vector<4x8x128xf32> to vector<4x8x128xbf16>
    "tpu.trace_start"() <{level = 10 : i32, message = "kij,kjd->kid"}> : () -> ()
    %cst_16 = arith.constant dense<0.000000e+00> : vector<4x8x128xf32>
    %27 = tpu.matmul %3, %26, %cst_16 {dimension_numbers = #tpu.dot_dimension_numbers<[2], [1], [1], [2], [0, 0, 0, 1, 1, 2], [0], [0]>} : vector<4x8x8xbf16>, vector<4x8x128xbf16>, vector<4x8x128xf32> -> vector<4x8x128xf32>
    "tpu.trace_stop"() : () -> ()
    %c1 = arith.constant 1 : index
    %28 = memref.load %arg1[%c1] : memref<2xf32, #tpu.memory_space<smem>>
    %29 = vector.broadcast %28 : f32 to vector<4x8x128xf32>
    %30 = arith.mulf %29, %25 : vector<4x8x128xf32>
    %31 = arith.addf %30, %27 : vector<4x8x128xf32>
    %32 = vector.shape_cast %31 : vector<4x8x128xf32> to vector<32x128xf32>
    %33 = arith.truncf %32 : vector<32x128xf32> to vector<32x128xbf16>
    %c0_17 = arith.constant 0 : index
    %c0_18 = arith.constant 0 : index
    %34 = vector.load %arg7[%c0_17, %c0_18] : memref<128x128xbf16, #tpu.memory_space<vmem>>, vector<128x128xbf16>
    %cst_19 = arith.constant dense<0.000000e+00> : vector<32x128xf32>
    %35 = tpu.matmul %33, %34, %cst_19 {dimension_numbers = #tpu.dot_dimension_numbers<[1], [0], [0], [1], [0, 0, 1, 1], [], []>} : vector<32x128xbf16>, vector<128x128xbf16>, vector<32x128xf32> -> vector<32x128xf32>
    %c0_20 = arith.constant 0 : index
    %c0_21 = arith.constant 0 : index
    %36 = vector.load %arg8[%c0_20, %c0_21] : memref<1x128xf32, #tpu.memory_space<vmem>>, vector<1x128xf32>
    %37 = vector.broadcast %36 : vector<1x128xf32> to vector<32x128xf32>
    %38 = arith.addf %35, %37 : vector<32x128xf32>
    %cst_22 = arith.constant 0.000000e+00 : f32
    %39 = vector.broadcast %cst_22 : f32 to vector<32x128xf32>
    %40 = arith.maximumf %38, %39 : vector<32x128xf32>
    %41 = vector.shape_cast %40 : vector<32x128xf32> to vector<4x8x128xf32>
    %cst_23 = arith.constant dense<0.000000e+00> : vector<8x128xf32>
    %42 = vector.multi_reduction <add>, %41, %cst_23 [0] : vector<4x8x128xf32> to vector<8x128xf32>
    %43 = arith.truncf %42 : vector<8x128xf32> to vector<8x128xbf16>
    %c0_24 = arith.constant 0 : index
    %c0_25 = arith.constant 0 : index
    %44 = vector.load %arg9[%c0_24, %c0_25] : memref<128x128xbf16, #tpu.memory_space<vmem>>, vector<128x128xbf16>
    %cst_26 = arith.constant dense<0.000000e+00> : vector<8x128xf32>
    %45 = tpu.matmul %43, %44, %cst_26 {dimension_numbers = #tpu.dot_dimension_numbers<[1], [0], [0], [1], [0, 0, 1, 1], [], []>} : vector<8x128xbf16>, vector<128x128xbf16>, vector<8x128xf32> -> vector<8x128xf32>
    %c0_i32 = arith.constant 0 : i32
    %46 = arith.cmpi eq, %arg0, %c0_i32 : i32
    %47 = arith.extui %46 : i1 to i32
    %c0_i32_27 = arith.constant 0 : i32
    %48 = arith.cmpi ne, %47, %c0_i32_27 : i32
    scf.if %48 {
      %c0_32 = arith.constant 0 : index
      %c0_33 = arith.constant 0 : index
      %52 = vector.load %arg10[%c0_32, %c0_33] : memref<1x128xf32, #tpu.memory_space<vmem>>, vector<1x128xf32>
      %cst_34 = arith.constant 8.000000e+00 : f32
      %53 = vector.broadcast %cst_34 : f32 to vector<1x128xf32>
      %54 = arith.mulf %53, %52 : vector<1x128xf32>
      %55 = vector.shape_cast %54 : vector<1x128xf32> to vector<1x128xf32>
      %56 = vector.broadcast %55 : vector<1x128xf32> to vector<8x128xf32>
      %c0_35 = arith.constant 0 : index
      %c0_36 = arith.constant 0 : index
      %57 = vector.load %arg12[%c0_35, %c0_36] : memref<8x128xf32, #tpu.memory_space<vmem>>, vector<8x128xf32>
      tpu.vector_store %arg12[%c0_35, %c0_36], %56 {strides = array<i32>} : memref<8x128xf32, #tpu.memory_space<vmem>>, vector<8x128xf32>,
    } else {
    }
    %c0_28 = arith.constant 0 : index
    %c0_29 = arith.constant 0 : index
    %49 = vector.load %arg12[%c0_28, %c0_29] : memref<8x128xf32, #tpu.memory_space<vmem>>, vector<8x128xf32>
    %50 = arith.addf %49, %45 : vector<8x128xf32>
    %c0_30 = arith.constant 0 : index
    %c0_31 = arith.constant 0 : index
    %51 = vector.load %arg12[%c0_30, %c0_31] : memref<8x128xf32, #tpu.memory_space<vmem>>, vector<8x128xf32>
    tpu.vector_store %arg12[%c0_30, %c0_31], %50 {strides = array<i32>} : memref<8x128xf32, #tpu.memory_space<vmem>>, vector<8x128xf32>,
    return
  }
  func.func @transform_0(%arg0: i32, %arg1: memref<2xf32, #tpu.memory_space<smem>>) -> (i32, i32) {
    %c0_i32 = arith.constant 0 : i32
    %c0_i32_0 = arith.constant 0 : i32
    %c0_i32_1 = arith.constant 0 : i32
    return %c0_i32, %c0_i32_0 : i32, i32
  }
  func.func @transform_1(%arg0: i32, %arg1: memref<2xf32, #tpu.memory_space<smem>>) -> (i32, i32) {
    %c0_i32 = arith.constant 0 : i32
    %c0_i32_0 = arith.constant 0 : i32
    %c0_i32_1 = arith.constant 0 : i32
    return %c0_i32, %c0_i32_0 : i32, i32
  }
  func.func @transform_2(%arg0: i32, %arg1: memref<2xf32, #tpu.memory_space<smem>>) -> (i32, i32) {
    %c0_i32 = arith.constant 0 : i32
    %c0_i32_0 = arith.constant 0 : i32
    %c0_i32_1 = arith.constant 0 : i32
    return %c0_i32, %c0_i32_0 : i32, i32
  }
  func.func @transform_3(%arg0: i32, %arg1: memref<2xf32, #tpu.memory_space<smem>>) -> (i32, i32) {
    %c0_i32 = arith.constant 0 : i32
    %c0_i32_0 = arith.constant 0 : i32
    %c0_i32_1 = arith.constant 0 : i32
    return %c0_i32, %c0_i32_0 : i32, i32
  }
  func.func @transform_4(%arg0: i32, %arg1: memref<2xf32, #tpu.memory_space<smem>>) -> (i32, i32) {
    %c0_i32 = arith.constant 0 : i32
    %c0_i32_0 = arith.constant 0 : i32
    %c0_i32_1 = arith.constant 0 : i32
    return %c0_i32, %c0_i32_0 : i32, i32
  }
  func.func @transform_5(%arg0: i32, %arg1: memref<2xf32, #tpu.memory_space<smem>>) -> (i32, i32) {
    %c0_i32 = arith.constant 0 : i32
    %c0_i32_0 = arith.constant 0 : i32
    %c0_i32_1 = arith.constant 0 : i32
    return %c0_i32, %c0_i32_0 : i32, i32
  }
  func.func @transform_6(%arg0: i32, %arg1: memref<2xf32, #tpu.memory_space<smem>>) -> (i32, i32) {
    %c0_i32 = arith.constant 0 : i32
    %c0_i32_0 = arith.constant 0 : i32
    %c0_i32_1 = arith.constant 0 : i32
    return %c0_i32, %c0_i32_0 : i32, i32
  }
  func.func @transform_7(%arg0: i32, %arg1: memref<2xf32, #tpu.memory_space<smem>>) -> (i32, i32) {
    %c0_i32 = arith.constant 0 : i32
    %c0_i32_0 = arith.constant 0 : i32
    %c0_i32_1 = arith.constant 0 : i32
    return %c0_i32, %c0_i32_0 : i32, i32
  }
  func.func @transform_8(%arg0: i32, %arg1: memref<2xf32, #tpu.memory_space<smem>>) -> (i32, i32) {
    %c0_i32 = arith.constant 0 : i32
    %c0_i32_0 = arith.constant 0 : i32
    %c0_i32_1 = arith.constant 0 : i32
    return %c0_i32, %c0_i32_0 : i32, i32
  }
  func.func @transform_9(%arg0: i32, %arg1: memref<2xf32, #tpu.memory_space<smem>>) -> (i32, i32, i32) {
    %c0_i32 = arith.constant 0 : i32
    %c0_i32_0 = arith.constant 0 : i32
    %c0_i32_1 = arith.constant 0 : i32
    return %arg0, %c0_i32, %c0_i32_0 : i32, i32, i32
  }
  func.func @transform_10(%arg0: i32, %arg1: memref<2xf32, #tpu.memory_space<smem>>) -> (i32, i32) {
    %c0_i32 = arith.constant 0 : i32
    %c0_i32_0 = arith.constant 0 : i32
    %c0_i32_1 = arith.constant 0 : i32
    return %c0_i32, %c0_i32_0 : i32, i32
  }
}

</mosaic_0001>

<llo_original>
// kernel: gin_sample_aggregator_forward.1
$region0: #{gin_sample_aggregator_forward.1}
  #allocation0 [shape = 'u32[]', space=smem, size = 0x4, offset = 0x4, fixed_abs, tag = 'smem constant byte address 0x4 - core index']
  #allocation1 [shape = 'u32[144,128]{1,0:T(1,128)}', space=vmem, size = 0x12000, scoped, tag = 'internal scratch']
  #allocation2 [shape = 's32[1]{0}', space=sflag, size = 0x4, scoped, tag = 'scoped memory for gin_sample_aggregator_forward.1']
  #allocation3 [shape = 'u8[512]{0}', space=smem, size = 0x200, scoped, tag = 'prefetched SMEM operand 0']
  %s0 = inlined_call_operand.vmem [shape: f32[2], index: 0, kind: input, shape index: {}]
  %s1 = inlined_call_operand.vmem [shape: bf16[8,8], index: 1, kind: input, shape index: {}]
  %s2 = inlined_call_operand.vmem [shape: bf16[128,128], index: 2, kind: input, shape index: {}]
  %s3 = inlined_call_operand.vmem [shape: f32[1,128], index: 3, kind: input, shape index: {}]
  %s4 = inlined_call_operand.vmem [shape: bf16[128,128], index: 4, kind: input, shape index: {}]
  %s5 = inlined_call_operand.vmem [shape: f32[1,128], index: 5, kind: input, shape index: {}]
  %s6 = inlined_call_operand.vmem [shape: bf16[128,128], index: 6, kind: input, shape index: {}]
  %s7 = inlined_call_operand.vmem [shape: f32[1,128], index: 7, kind: input, shape index: {}]
  %s8 = inlined_call_operand.vmem [shape: bf16[128,128], index: 8, kind: input, shape index: {}]
  %s9 = inlined_call_operand.vmem [shape: f32[1,128], index: 9, kind: input, shape index: {}]
  %s10 = inlined_call_operand.vmem [shape: f32[8,8,128], index: 10, kind: input, shape index: {}]
  %s11 = inlined_call_operand.hbm [shape: f32[8,128], index: 11, kind: output, shape index: {}]
  %s12 = sld [smem:[#allocation0]]
  $region77: #{gin_sample_aggregator_forward.1} parent=0
    _
  %s14 = ssub.s32 1, %s12
  %s15 = scalar_select 0, %s14, %s12
  %s16 = sshll.u32 %s0, 4
  %s17 = int_to_ptr.vmem [resolvable:$true] %s16
  %19 = dma.vmem_to_smem %s17, 16, [#allocation3], [#allocation2]
  %20 = dma.done [#allocation2], 16
  %21 = sfence
  $region1: #{gin_sample_aggregator_forward.1} parent=0
    #allocation4 [shape = 'u8[4096]{0}', space=vmem, size = 0x1000, scoped, tag = 'output window, operand 0, single buffered']
    #allocation5 [shape = 's32[2]{0}', space=sflag, size = 0x8, scoped, tag = 'scoped memory for gin_sample_aggregator_forward.1']
    %22 = vsyncpa [#allocation5], 0
    loop: start=0, step=1, limit=4
    $region2: #{gin_sample_aggregator_forward.1} parent=1 // loop_pre_header
      _
    $region3: #{gin_sample_aggregator_forward.1} parent=1 // loop_header
      %s24 = sphi 0, %s28
      %p25 = scmp.ge.s32.totalorder %s24, 4
      %s32 = sphi 0, %s32
      %s34 = sphi 0, %s32
      %s35 = sphi 0, %s34
      %s49 = sphi 0, %s35
      %s53 = sphi 0, %s53
      %s55 = sphi 0, %s53
      %s56 = sphi 0, %s55
      %s70 = sphi 0, %s56
      %s74 = sphi 0, %s74
      %s76 = sphi 0, %s74
      %s77 = sphi 0, %s76
      %s91 = sphi 0, %s77
      %s95 = sphi 0, %s95
      %s97 = sphi 0, %s95
      %s98 = sphi 0, %s97
      %s112 = sphi 0, %s98
      %s116 = sphi 0, %s116
      %s118 = sphi 0, %s116
      %s119 = sphi 0, %s118
      %s133 = sphi 0, %s119
      %s137 = sphi 0, %s137
      %s139 = sphi 0, %s137
      %s140 = sphi 0, %s139
      %s154 = sphi 0, %s140
      %s158 = sphi 0, %s158
      %s160 = sphi 0, %s158
      %s161 = sphi 0, %s160
      %s175 = sphi 0, %s161
      %s179 = sphi 0, %s179
      %s181 = sphi 0, %s179
      %s182 = sphi 0, %s181
      %s196 = sphi 0, %s182
      %s200 = sphi 0, %s200
      %s202 = sphi 0, %s200
      %s203 = sphi 0, %s202
      %s217 = sphi 0, %s203
      %s223 = sphi 0, %s225
      %s226 = sphi 0, %s223
      %s227 = sphi 0, %s226
      %s243 = sphi 0, %s227
      %s247 = sphi 0, %s247
      %s249 = sphi 0, %s247
      %s250 = sphi 0, %s249
      %s264 = sphi 0, %s250
    $region4: #{gin_sample_aggregator_forward.1} parent=1 // loop_header_branch
      %27 = sbr.rel (%p25) target = $region8
    $region5: #{gin_sample_aggregator_forward.1} parent=1 // loop_body
      %s29 = ssub.s32 %s24, 1
      %s30 = ssub.s32 %s24, 2
      %s31 = sadd.s32 %s24, 1
      %s33 = sadd.s32 %s32, 1
      %p36 = scmp.eq.s32.totalorder %s24, 1
      %p37 = scmp.ne.s32.totalorder %s32, %s34
      %p38 = scmp.eq.s32.totalorder %s24, 0
      %p39 = por %p37, %p38
      %p40 = scmp.ne.s32.totalorder %s32, %s34
      %p41 = scmp.eq.s32.totalorder %s29, 1
      %p42 = por %p40, %p41
      %p43 = scmp.ne.s32.totalorder %s34, %s35
      %p44 = scmp.eq.s32.totalorder %s29, 0
      %p45 = por %p43, %p44
      %p46 = scmp.ne.s32.totalorder %s34, %s35
      %p47 = scmp.eq.s32.totalorder %s30, 1
      %p48 = por %p46, %p47
      %p50 = scmp.ne.s32.totalorder %s35, %s49
      %p51 = scmp.eq.s32.totalorder %s30, 0
      %p52 = por %p50, %p51
      %s54 = sadd.s32 %s53, 1
      %p57 = scmp.eq.s32.totalorder %s24, 1
      %p58 = scmp.ne.s32.totalorder %s53, %s55
      %p59 = scmp.eq.s32.totalorder %s24, 0
      %p60 = por %p58, %p59
      %p61 = scmp.ne.s32.totalorder %s53, %s55
      %p62 = scmp.eq.s32.totalorder %s29, 1
      %p63 = por %p61, %p62
      %p64 = scmp.ne.s32.totalorder %s55, %s56
      %p65 = scmp.eq.s32.totalorder %s29, 0
      %p66 = por %p64, %p65
      %p67 = scmp.ne.s32.totalorder %s55, %s56
      %p68 = scmp.eq.s32.totalorder %s30, 1
      %p69 = por %p67, %p68
      %p71 = scmp.ne.s32.totalorder %s56, %s70
      %p72 = scmp.eq.s32.totalorder %s30, 0
      %p73 = por %p71, %p72
      %s75 = sadd.s32 %s74, 1
      %p78 = scmp.eq.s32.totalorder %s24, 1
      %p79 = scmp.ne.s32.totalorder %s74, %s76
      %p80 = scmp.eq.s32.totalorder %s24, 0
      %p81 = por %p79, %p80
      %p82 = scmp.ne.s32.totalorder %s74, %s76
      %p83 = scmp.eq.s32.totalorder %s29, 1
      %p84 = por %p82, %p83
      %p85 = scmp.ne.s32.totalorder %s76, %s77
      %p86 = scmp.eq.s32.totalorder %s29, 0
      %p87 = por %p85, %p86
      %p88 = scmp.ne.s32.totalorder %s76, %s77
      %p89 = scmp.eq.s32.totalorder %s30, 1
      %p90 = por %p88, %p89
      %p92 = scmp.ne.s32.totalorder %s77, %s91
      %p93 = scmp.eq.s32.totalorder %s30, 0
      %p94 = por %p92, %p93
      %s96 = sadd.s32 %s95, 1
      %p99 = scmp.eq.s32.totalorder %s24, 1
      %p100 = scmp.ne.s32.totalorder %s95, %s97
      %p101 = scmp.eq.s32.totalorder %s24, 0
      %p102 = por %p100, %p101
      %p103 = scmp.ne.s32.totalorder %s95, %s97
      %p104 = scmp.eq.s32.totalorder %s29, 1
      %p105 = por %p103, %p104
      %p106 = scmp.ne.s32.totalorder %s97, %s98
      %p107 = scmp.eq.s32.totalorder %s29, 0
      %p108 = por %p106, %p107
      %p109 = scmp.ne.s32.totalorder %s97, %s98
      %p110 = scmp.eq.s32.totalorder %s30, 1
      %p111 = por %p109, %p110
      %p113 = scmp.ne.s32.totalorder %s98, %s112
      %p114 = scmp.eq.s32.totalorder %s30, 0
      %p115 = por %p113, %p114
      %s117 = sadd.s32 %s116, 1
      %p120 = scmp.eq.s32.totalorder %s24, 1
      %p121 = scmp.ne.s32.totalorder %s116, %s118
      %p122 = scmp.eq.s32.totalorder %s24, 0
      %p123 = por %p121, %p122
      %p124 = scmp.ne.s32.totalorder %s116, %s118
      %p125 = scmp.eq.s32.totalorder %s29, 1
      %p126 = por %p124, %p125
      %p127 = scmp.ne.s32.totalorder %s118, %s119
      %p128 = scmp.eq.s32.totalorder %s29, 0
      %p129 = por %p127, %p128
      %p130 = scmp.ne.s32.totalorder %s118, %s119
      %p131 = scmp.eq.s32.totalorder %s30, 1
      %p132 = por %p130, %p131
      %p134 = scmp.ne.s32.totalorder %s119, %s133
      %p135 = scmp.eq.s32.totalorder %s30, 0
      %p136 = por %p134, %p135
      %s138 = sadd.s32 %s137, 1
      %p141 = scmp.eq.s32.totalorder %s24, 1
      %p142 = scmp.ne.s32.totalorder %s137, %s139
      %p143 = scmp.eq.s32.totalorder %s24, 0
      %p144 = por %p142, %p143
      %p145 = scmp.ne.s32.totalorder %s137, %s139
      %p146 = scmp.eq.s32.totalorder %s29, 1
      %p147 = por %p145, %p146
      %p148 = scmp.ne.s32.totalorder %s139, %s140
      %p149 = scmp.eq.s32.totalorder %s29, 0
      %p150 = por %p148, %p149
      %p151 = scmp.ne.s32.totalorder %s139, %s140
      %p152 = scmp.eq.s32.totalorder %s30, 1
      %p153 = por %p151, %p152
      %p155 = scmp.ne.s32.totalorder %s140, %s154
      %p156 = scmp.eq.s32.totalorder %s30, 0
      %p157 = por %p155, %p156
      %s159 = sadd.s32 %s158, 1
      %p162 = scmp.eq.s32.totalorder %s24, 1
      %p163 = scmp.ne.s32.totalorder %s158, %s160
      %p164 = scmp.eq.s32.totalorder %s24, 0
      %p165 = por %p163, %p164
      %p166 = scmp.ne.s32.totalorder %s158, %s160
      %p167 = scmp.eq.s32.totalorder %s29, 1
      %p168 = por %p166, %p167
      %p169 = scmp.ne.s32.totalorder %s160, %s161
      %p170 = scmp.eq.s32.totalorder %s29, 0
      %p171 = por %p169, %p170
      %p172 = scmp.ne.s32.totalorder %s160, %s161
      %p173 = scmp.eq.s32.totalorder %s30, 1
      %p174 = por %p172, %p173
      %p176 = scmp.ne.s32.totalorder %s161, %s175
      %p177 = scmp.eq.s32.totalorder %s30, 0
      %p178 = por %p176, %p177
      %s180 = sadd.s32 %s179, 1
      %p183 = scmp.eq.s32.totalorder %s24, 1
      %p184 = scmp.ne.s32.totalorder %s179, %s181
      %p185 = scmp.eq.s32.totalorder %s24, 0
      %p186 = por %p184, %p185
      %p187 = scmp.ne.s32.totalorder %s179, %s181
      %p188 = scmp.eq.s32.totalorder %s29, 1
      %p189 = por %p187, %p188
      %p190 = scmp.ne.s32.totalorder %s181, %s182
      %p191 = scmp.eq.s32.totalorder %s29, 0
      %p192 = por %p190, %p191
      %p193 = scmp.ne.s32.totalorder %s181, %s182
      %p194 = scmp.eq.s32.totalorder %s30, 1
      %p195 = por %p193, %p194
      %p197 = scmp.ne.s32.totalorder %s182, %s196
      %p198 = scmp.eq.s32.totalorder %s30, 0
      %p199 = por %p197, %p198
      %s201 = sadd.s32 %s200, 1
      %p204 = scmp.eq.s32.totalorder %s24, 1
      %p205 = scmp.ne.s32.totalorder %s200, %s202
      %p206 = scmp.eq.s32.totalorder %s24, 0
      %p207 = por %p205, %p206
      %p208 = scmp.ne.s32.totalorder %s200, %s202
      %p209 = scmp.eq.s32.totalorder %s29, 1
      %p210 = por %p208, %p209
      %p211 = scmp.ne.s32.totalorder %s202, %s203
      %p212 = scmp.eq.s32.totalorder %s29, 0
      %p213 = por %p211, %p212
      %p214 = scmp.ne.s32.totalorder %s202, %s203
      %p215 = scmp.eq.s32.totalorder %s30, 1
      %p216 = por %p214, %p215
      %p218 = scmp.ne.s32.totalorder %s203, %s217
      %p219 = scmp.eq.s32.totalorder %s30, 0
      %p220 = por %p218, %p219
      %s221 = ssub.s32 %s24, %s31
      %p222 = scmp.eq.s32.totalorder %s221, 0
      %s224 = sadd.s32 %s223, 1
      %s225 = scalar_select %p222, %s223, %s224
      %p228 = pneg %p222
      %p229 = scmp.eq.s32.totalorder %s24, 1
      %p230 = por %p228, %p229
      %p231 = scmp.ne.s32.totalorder %s223, %s226
      %p232 = scmp.eq.s32.totalorder %s24, 0
      %p233 = por %p231, %p232
      %p234 = scmp.ne.s32.totalorder %s223, %s226
      %p235 = scmp.eq.s32.totalorder %s29, 1
      %p236 = por %p234, %p235
      %p237 = scmp.ne.s32.totalorder %s226, %s227
      %p238 = scmp.eq.s32.totalorder %s29, 0
      %p239 = por %p237, %p238
      %p240 = scmp.ne.s32.totalorder %s226, %s227
      %p241 = scmp.eq.s32.totalorder %s30, 1
      %p242 = por %p240, %p241
      %p244 = scmp.ne.s32.totalorder %s227, %s243
      %p245 = scmp.eq.s32.totalorder %s30, 0
      %p246 = por %p244, %p245
      %s248 = sadd.s32 %s247, 1
      %p251 = scmp.eq.s32.totalorder %s24, 1
      %p252 = scmp.ne.s32.totalorder %s247, %s249
      %p253 = scmp.eq.s32.totalorder %s24, 0
      %p254 = por %p252, %p253
      %p255 = scmp.ne.s32.totalorder %s247, %s249
      %p256 = scmp.eq.s32.totalorder %s29, 1
      %p257 = por %p255, %p256
      %p258 = scmp.ne.s32.totalorder %s249, %s250
      %p259 = scmp.eq.s32.totalorder %s29, 0
      %p260 = por %p258, %p259
      %p261 = scmp.ne.s32.totalorder %s249, %s250
      %p262 = scmp.eq.s32.totalorder %s30, 1
      %p263 = por %p261, %p262
      %p265 = scmp.ne.s32.totalorder %s250, %s264
      %p266 = scmp.eq.s32.totalorder %s30, 0
      %p267 = por %p265, %p266
      %p268 = scmp.le.s32.totalorder 1, %s24
      %p269 = scmp.lt.s32.totalorder %s24, 3
      %p270 = pnand %p268, %p269
      %p271 = pneg %p270
      // Predicated region
      $region9: #{gin_sample_aggregator_forward.1} parent=5 // pred_check
        _
      $region10: #{gin_sample_aggregator_forward.1} parent=5 // pred_check_branch
        %273 = sbr.rel (%p270) target = $region12
      $region11: #{gin_sample_aggregator_forward.1} parent=5 // pred_region
        %s274 = ssub.s32 %s24, 1
        // Predicated region
        $region13: #{gin_sample_aggregator_forward.1} parent=11 // pred_check
          %p275 = pneg %p45
        $region14: #{gin_sample_aggregator_forward.1} parent=11 // pred_check_branch
          %277 = sbr.rel (%p275) target = $region16
        $region15: #{gin_sample_aggregator_forward.1} parent=11 // pred_region
          _
        $region16: #{gin_sample_aggregator_forward.1} parent=11 // pred_fallthru
          _
        // Predicated region
        $region17: #{gin_sample_aggregator_forward.1} parent=11 // pred_check
          %p278 = pneg %p66
        $region18: #{gin_sample_aggregator_forward.1} parent=11 // pred_check_branch
          %280 = sbr.rel (%p278) target = $region20
        $region19: #{gin_sample_aggregator_forward.1} parent=11 // pred_region
          _
        $region20: #{gin_sample_aggregator_forward.1} parent=11 // pred_fallthru
          _
        // Predicated region
        $region21: #{gin_sample_aggregator_forward.1} parent=11 // pred_check
          %p281 = pneg %p87
        $region22: #{gin_sample_aggregator_forward.1} parent=11 // pred_check_branch
          %283 = sbr.rel (%p281) target = $region24
        $region23: #{gin_sample_aggregator_forward.1} parent=11 // pred_region
          _
        $region24: #{gin_sample_aggregator_forward.1} parent=11 // pred_fallthru
          _
        // Predicated region
        $region25: #{gin_sample_aggregator_forward.1} parent=11 // pred_check
          %p284 = pneg %p108
        $region26: #{gin_sample_aggregator_forward.1} parent=11 // pred_check_branch
          %286 = sbr.rel (%p284) target = $region28
        $region27: #{gin_sample_aggregator_forward.1} parent=11 // pred_region
          _
        $region28: #{gin_sample_aggregator_forward.1} parent=11 // pred_fallthru
          _
        // Predicated region
        $region29: #{gin_sample_aggregator_forward.1} parent=11 // pred_check
          %p287 = pneg %p129
        $region30: #{gin_sample_aggregator_forward.1} parent=11 // pred_check_branch
          %289 = sbr.rel (%p287) target = $region32
        $region31: #{gin_sample_aggregator_forward.1} parent=11 // pred_region
          _
        $region32: #{gin_sample_aggregator_forward.1} parent=11 // pred_fallthru
          _
        // Predicated region
        $region33: #{gin_sample_aggregator_forward.1} parent=11 // pred_check
          %p290 = pneg %p150
        $region34: #{gin_sample_aggregator_forward.1} parent=11 // pred_check_branch
          %292 = sbr.rel (%p290) target = $region36
        $region35: #{gin_sample_aggregator_forward.1} parent=11 // pred_region
          _
        $region36: #{gin_sample_aggregator_forward.1} parent=11 // pred_fallthru
          _
        // Predicated region
        $region37: #{gin_sample_aggregator_forward.1} parent=11 // pred_check
          %p293 = pneg %p171
        $region38: #{gin_sample_aggregator_forward.1} parent=11 // pred_check_branch
          %295 = sbr.rel (%p293) target = $region40
        $region39: #{gin_sample_aggregator_forward.1} parent=11 // pred_region
          _
        $region40: #{gin_sample_aggregator_forward.1} parent=11 // pred_fallthru
          _
        // Predicated region
        $region41: #{gin_sample_aggregator_forward.1} parent=11 // pred_check
          %p296 = pneg %p192
        $region42: #{gin_sample_aggregator_forward.1} parent=11 // pred_check_branch
          %298 = sbr.rel (%p296) target = $region44
        $region43: #{gin_sample_aggregator_forward.1} parent=11 // pred_region
          _
        $region44: #{gin_sample_aggregator_forward.1} parent=11 // pred_fallthru
          _
        // Predicated region
        $region45: #{gin_sample_aggregator_forward.1} parent=11 // pred_check
          %p299 = pneg %p213
        $region46: #{gin_sample_aggregator_forward.1} parent=11 // pred_check_branch
          %301 = sbr.rel (%p299) target = $region48
        $region47: #{gin_sample_aggregator_forward.1} parent=11 // pred_region
          _
        $region48: #{gin_sample_aggregator_forward.1} parent=11 // pred_fallthru
          _
      $region12: #{gin_sample_aggregator_forward.1} parent=5 // pred_fallthru
        _
      %p302 = scmp.lt.s32.totalorder %s24, 2
      // Predicated region
      $region49: #{gin_sample_aggregator_forward.1} parent=5 // pred_check
        %p303 = pneg %p302
      $region50: #{gin_sample_aggregator_forward.1} parent=5 // pred_check_branch
        %305 = sbr.rel (%p303) target = $region52
      $region51: #{gin_sample_aggregator_forward.1} parent=5 // pred_region
        // Predicated region
        $region53: #{gin_sample_aggregator_forward.1} parent=51 // pred_check
          %p306 = pneg %p233
        $region54: #{gin_sample_aggregator_forward.1} parent=51 // pred_check_branch
          %308 = sbr.rel (%p306) target = $region56
        $region55: #{gin_sample_aggregator_forward.1} parent=51 // pred_region
          %s309 = smul.u32 4, %s24
          %p310 = scmp.lt.s32.totalorder %s309, 7
          %s311 = scalar_select %p310, %s309, 7
          %s312 = smul.addr %s311, 8
          %s313 = scalar_lea.vmem %s10, %s312
          %s314 = smul.u32 4, %s24
        $region56: #{gin_sample_aggregator_forward.1} parent=51 // pred_fallthru
          _
      $region52: #{gin_sample_aggregator_forward.1} parent=5 // pred_fallthru
        _
      %p315 = scmp.le.s32.totalorder 1, %s24
      %p316 = scmp.lt.s32.totalorder %s24, 3
      %p317 = pnand %p315, %p316
      %p318 = pneg %p317
      // Predicated region
      $region57: #{gin_sample_aggregator_forward.1} parent=5 // pred_check
        _
      $region58: #{gin_sample_aggregator_forward.1} parent=5 // pred_check_branch
        %320 = sbr.rel (%p317) target = $region60
      $region59: #{gin_sample_aggregator_forward.1} parent=5 // pred_region
        %s321 = ssub.s32 %s24, 1
        %p322 = pneg %p45
        %p323 = pneg %p42
        %p324 = pneg %p66
        %p325 = pneg %p63
        %p326 = pneg %p87
        %p327 = pneg %p84
        %p328 = pneg %p108
        %p329 = pneg %p105
        %p330 = pneg %p129
        %p331 = pneg %p126
        %p332 = pneg %p150
        %p333 = pneg %p147
        %p334 = pneg %p171
        %p335 = pneg %p168
        %p336 = pneg %p192
        %p337 = pneg %p189
        %p338 = pneg %p213
        %p339 = pneg %p210
        %s340 = smul.u32 4, %s29
        %p341 = scmp.lt.s32.totalorder %s340, 7
        %s342 = scalar_select %p341, %s340, 7
        %s343 = smul.addr %s342, 8
        %s344 = scalar_lea.vmem %s10, %s343
        %p345 = pneg %p239
        %p346 = pneg %p236
        %p347 = pneg %p260
        %p348 = pneg %p257
        %s349 = smul.u32 4, %s29
        %p350 = scmp.lt.s32.totalorder %s349, 7
        %s351 = scalar_select %p350, %s349, 7
        %s352 = smul.addr %s351, 8
        %s353 = scalar_lea.vmem %s10, %s352
        %s354 = smul.u32 4, %s29
        %v356 = vld [vmem:[%s353] sm:$0xff]
        %v357 = vld [vmem:[%s353 + $0x8] sm:$0xff]
        %v358 = vld [vmem:[%s353 + $0x10] sm:$0xff]
        %v359 = vld [vmem:[%s353 + $0x18] sm:$0xff]
        %v360 = vld [vmem:[%s1] sm:$0xf]
        %v361 = vpack.c.bf16 %v356, %v356
        %v362 = vpack.c.bf16 %v357, %v357
        %v363 = vpack.c.bf16 %v358, %v358
        %v364 = vpack.c.bf16 %v359, %v359
        %vm365 = vcmask 64512
        %v367 = vsel %vm365, %v360, 0
        %vm369 = vcmask 1043456
        %v371 = vsel %vm369, %v361, 0
        %373 = vmatprep.subr.bf16.mxu0 0
        %374 = vmatpush1.bf16.msra.mxu0 %v371
        %375 = vmatprep.subr.bf16.mxu0 0
        %376 = vmatpush1.bf16.msra.mxu0 0
        %377 = vmatprep.subr.bf16.mxu0 0
        %378 = vmatpush1.bf16.msra.mxu0 0
        %379 = vmatprep.subr.bf16.mxu0 0
        %380 = vmatpush1.bf16.msra.mxu0 0
        %381 = vmatprep.subr.bf16.mxu0 0
        %382 = vmatpush1.bf16.msra.mxu0 0
        %383 = vmatprep.subr.bf16.mxu0 0
        %384 = vmatpush1.bf16.msra.mxu0 0
        %385 = vmatprep.subr.bf16.mxu0 0
        %386 = vmatpush1.bf16.msra.mxu0 0
        %387 = vmatprep.subr.bf16.mxu0 0
        %388 = vmatpush1.bf16.msra.mxu0 0
        %389 = vmatprep.subr.bf16.mxu0 0
        %390 = vmatpush1.bf16.msra.mxu0 0
        %391 = vmatprep.subr.bf16.mxu0 0
        %392 = vmatpush1.bf16.msra.mxu0 0
        %393 = vmatprep.subr.bf16.mxu0 0
        %394 = vmatpush1.bf16.msra.mxu0 0
        %395 = vmatprep.subr.bf16.mxu0 0
        %396 = vmatpush1.bf16.msra.mxu0 0
        %397 = vmatprep.subr.bf16.mxu0 0
        %398 = vmatpush1.bf16.msra.mxu0 0
        %399 = vmatprep.subr.bf16.mxu0 0
        %400 = vmatpush1.bf16.msra.mxu0 0
        %401 = vmatprep.subr.bf16.mxu0 0
        %402 = vmatpush1.bf16.msra.mxu0 0
        %403 = vmatprep.subr.bf16.mxu0 0
        %404 = vmatpush1.bf16.msra.mxu0 0
        %405 = vmatprep.mubr.bf16.mxu0 0
        %406 = vmatmul.mubr.bf16.gmra.mrb[0].mxu0 %v367
        %v407 = vpop.f32.mrb[0].mxu0
        %v408 = vadd.f32 0.0, %v407
        %v409 = vpop.f32.mrb[0].mxu0
        %v410 = vpop.f32.mrb[0].mxu0
        %v411 = vpop.f32.mrb[0].mxu0
        %412 = vdwg.mxu0
        %v414 = vsel %vm369, %v362, 0
        %416 = vmatprep.subr.bf16.mxu0 0
        %417 = vmatpush1.bf16.msra.mxu0 %v414
        %418 = vmatprep.subr.bf16.mxu0 0
        %419 = vmatpush1.bf16.msra.mxu0 0
        %420 = vmatprep.subr.bf16.mxu0 0
        %421 = vmatpush1.bf16.msra.mxu0 0
        %422 = vmatprep.subr.bf16.mxu0 0
        %423 = vmatpush1.bf16.msra.mxu0 0
        %424 = vmatprep.subr.bf16.mxu0 0
        %425 = vmatpush1.bf16.msra.mxu0 0
        %426 = vmatprep.subr.bf16.mxu0 0
        %427 = vmatpush1.bf16.msra.mxu0 0
        %428 = vmatprep.subr.bf16.mxu0 0
        %429 = vmatpush1.bf16.msra.mxu0 0
        %430 = vmatprep.subr.bf16.mxu0 0
        %431 = vmatpush1.bf16.msra.mxu0 0
        %432 = vmatprep.subr.bf16.mxu0 0
        %433 = vmatpush1.bf16.msra.mxu0 0
        %434 = vmatprep.subr.bf16.mxu0 0
        %435 = vmatpush1.bf16.msra.mxu0 0
        %436 = vmatprep.subr.bf16.mxu0 0
        %437 = vmatpush1.bf16.msra.mxu0 0
        %438 = vmatprep.subr.bf16.mxu0 0
        %439 = vmatpush1.bf16.msra.mxu0 0
        %440 = vmatprep.subr.bf16.mxu0 0
        %441 = vmatpush1.bf16.msra.mxu0 0
        %442 = vmatprep.subr.bf16.mxu0 0
        %443 = vmatpush1.bf16.msra.mxu0 0
        %444 = vmatprep.subr.bf16.mxu0 0
        %445 = vmatpush1.bf16.msra.mxu0 0
        %446 = vmatprep.subr.bf16.mxu0 0
        %447 = vmatpush1.bf16.msra.mxu0 0
        %448 = vmatprep.mubr.bf16.mxu0 0
        %449 = vmatmul.mubr.bf16.gmra.mrb[0].mxu0 %v367
        %v450 = vpop.f32.mrb[0].mxu0
        %v451 = vadd.f32 0.0, %v450
        %v452 = vpop.f32.mrb[0].mxu0
        %v453 = vpop.f32.mrb[0].mxu0
        %v454 = vpop.f32.mrb[0].mxu0
        %455 = vdwg.mxu0
        %v457 = vsel %vm369, %v363, 0
        %459 = vmatprep.subr.bf16.mxu0 0
        %460 = vmatpush1.bf16.msra.mxu0 %v457
        %461 = vmatprep.subr.bf16.mxu0 0
        %462 = vmatpush1.bf16.msra.mxu0 0
        %463 = vmatprep.subr.bf16.mxu0 0
        %464 = vmatpush1.bf16.msra.mxu0 0
        %465 = vmatprep.subr.bf16.mxu0 0
        %466 = vmatpush1.bf16.msra.mxu0 0
        %467 = vmatprep.subr.bf16.mxu0 0
        %468 = vmatpush1.bf16.msra.mxu0 0
        %469 = vmatprep.subr.bf16.mxu0 0
        %470 = vmatpush1.bf16.msra.mxu0 0
        %471 = vmatprep.subr.bf16.mxu0 0
        %472 = vmatpush1.bf16.msra.mxu0 0
        %473 = vmatprep.subr.bf16.mxu0 0
        %474 = vmatpush1.bf16.msra.mxu0 0
        %475 = vmatprep.subr.bf16.mxu0 0
        %476 = vmatpush1.bf16.msra.mxu0 0
        %477 = vmatprep.subr.bf16.mxu0 0
        %478 = vmatpush1.bf16.msra.mxu0 0
        %479 = vmatprep.subr.bf16.mxu0 0
        %480 = vmatpush1.bf16.msra.mxu0 0
        %481 = vmatprep.subr.bf16.mxu0 0
        %482 = vmatpush1.bf16.msra.mxu0 0
        %483 = vmatprep.subr.bf16.mxu0 0
        %484 = vmatpush1.bf16.msra.mxu0 0
        %485 = vmatprep.subr.bf16.mxu0 0
        %486 = vmatpush1.bf16.msra.mxu0 0
        %487 = vmatprep.subr.bf16.mxu0 0
        %488 = vmatpush1.bf16.msra.mxu0 0
        %489 = vmatprep.subr.bf16.mxu0 0
        %490 = vmatpush1.bf16.msra.mxu0 0
        %491 = vmatprep.mubr.bf16.mxu0 0
        %492 = vmatmul.mubr.bf16.gmra.mrb[0].mxu0 %v367
        %v493 = vpop.f32.mrb[0].mxu0
        %v494 = vadd.f32 0.0, %v493
        %v495 = vpop.f32.mrb[0].mxu0
        %v496 = vpop.f32.mrb[0].mxu0
        %v497 = vpop.f32.mrb[0].mxu0
        %498 = vdwg.mxu0
        %v500 = vsel %vm369, %v364, 0
        %502 = vmatprep.subr.bf16.mxu0 0
        %503 = vmatpush1.bf16.msra.mxu0 %v500
        %504 = vmatprep.subr.bf16.mxu0 0
        %505 = vmatpush1.bf16.msra.mxu0 0
        %506 = vmatprep.subr.bf16.mxu0 0
        %507 = vmatpush1.bf16.msra.mxu0 0
        %508 = vmatprep.subr.bf16.mxu0 0
        %509 = vmatpush1.bf16.msra.mxu0 0
        %510 = vmatprep.subr.bf16.mxu0 0
        %511 = vmatpush1.bf16.msra.mxu0 0
        %512 = vmatprep.subr.bf16.mxu0 0
        %513 = vmatpush1.bf16.msra.mxu0 0
        %514 = vmatprep.subr.bf16.mxu0 0
        %515 = vmatpush1.bf16.msra.mxu0 0
        %516 = vmatprep.subr.bf16.mxu0 0
        %517 = vmatpush1.bf16.msra.mxu0 0
        %518 = vmatprep.subr.bf16.mxu0 0
        %519 = vmatpush1.bf16.msra.mxu0 0
        %520 = vmatprep.subr.bf16.mxu0 0
        %521 = vmatpush1.bf16.msra.mxu0 0
        %522 = vmatprep.subr.bf16.mxu0 0
        %523 = vmatpush1.bf16.msra.mxu0 0
        %524 = vmatprep.subr.bf16.mxu0 0
        %525 = vmatpush1.bf16.msra.mxu0 0
        %526 = vmatprep.subr.bf16.mxu0 0
        %527 = vmatpush1.bf16.msra.mxu0 0
        %528 = vmatprep.subr.bf16.mxu0 0
        %529 = vmatpush1.bf16.msra.mxu0 0
        %530 = vmatprep.subr.bf16.mxu0 0
        %531 = vmatpush1.bf16.msra.mxu0 0
        %532 = vmatprep.subr.bf16.mxu0 0
        %533 = vmatpush1.bf16.msra.mxu0 0
        %534 = vmatprep.mubr.bf16.mxu0 0
        %535 = vmatmul.mubr.bf16.gmra.mrb[0].mxu0 %v367
        %v536 = vpop.f32.mrb[0].mxu0
        %v537 = vadd.f32 0.0, %v536
        %v538 = vpop.f32.mrb[0].mxu0
        %v539 = vpop.f32.mrb[0].mxu0
        %v540 = vpop.f32.mrb[0].mxu0
        %541 = vdwg.mxu0
        %s542 = sld [smem:[#allocation3]]
        %v543 = vstv %s542
        %v544 = vmul.f32 %v543, %v356
        %v545 = vmul.f32 %v543, %v357
        %v546 = vmul.f32 %v543, %v358
        %v547 = vmul.f32 %v543, %v359
        %v548 = vadd.f32 %v544, %v408
        %v549 = vadd.f32 %v545, %v451
        %v550 = vadd.f32 %v546, %v494
        %v551 = vadd.f32 %v547, %v537
        %v552 = vpack.c.bf16 %v549, %v548
        %v553 = vpack.c.bf16 %v551, %v550
        %v554 = vld [vmem:[%s2] sm:$0xf]
        %v555 = vld [vmem:[%s2 + $0x4] sm:$0xf]
        %v556 = vld [vmem:[%s2 + $0x8] sm:$0xf]
        %v557 = vld [vmem:[%s2 + $0xc] sm:$0xf]
        %v558 = vld [vmem:[%s2 + $0x10] sm:$0xf]
        %v559 = vld [vmem:[%s2 + $0x14] sm:$0xf]
        %v560 = vld [vmem:[%s2 + $0x18] sm:$0xf]
        %v561 = vld [vmem:[%s2 + $0x1c] sm:$0xf]
        %v562 = vld [vmem:[%s2 + $0x20] sm:$0xf]
        %v563 = vld [vmem:[%s2 + $0x24] sm:$0xf]
        %v564 = vld [vmem:[%s2 + $0x28] sm:$0xf]
        %v565 = vld [vmem:[%s2 + $0x2c] sm:$0xf]
        %v566 = vld [vmem:[%s2 + $0x30] sm:$0xf]
        %v567 = vld [vmem:[%s2 + $0x34] sm:$0xf]
        %v568 = vld [vmem:[%s2 + $0x38] sm:$0xf]
        %v569 = vld [vmem:[%s2 + $0x3c] sm:$0xf]
        %v570 = vld [vmem:[%s3] sm:$0x1]
        %v572 = vlaneseq
        %v573 = vshrl.u32 %v572, 7
        %v574 = vsub.s32 0, %v573
        %v575 = vrot.slane %v570, %v574
        %v593 = vunpack.c.l.b16 %v554
        %v594 = vunpack.c.l.b16 %v555
        %v595 = vunpack.c.l.b16 %v556
        %v596 = vunpack.c.l.b16 %v557
        %v597 = vunpack.c.l.b16 %v558
        %v598 = vunpack.c.l.b16 %v559
        %v599 = vunpack.c.l.b16 %v560
        %v600 = vunpack.c.l.b16 %v561
        %v601 = vunpack.c.l.b16 %v562
        %v602 = vunpack.c.l.b16 %v563
        %v603 = vunpack.c.l.b16 %v564
        %v604 = vunpack.c.l.b16 %v565
        %v605 = vunpack.c.l.b16 %v566
        %v606 = vunpack.c.l.b16 %v567
        %v607 = vunpack.c.l.b16 %v568
        %v608 = vunpack.c.l.b16 %v569
        %v609 = vpack.c.b16 %v594, %v593
        %v610 = vpack.c.b16 %v596, %v595
        %v611 = vpack.c.b16 %v598, %v597
        %v612 = vpack.c.b16 %v600, %v599
        %v613 = vpack.c.b16 %v602, %v601
        %v614 = vpack.c.b16 %v604, %v603
        %v615 = vpack.c.b16 %v606, %v605
        %v616 = vpack.c.b16 %v608, %v607
        %625 = vmatprep.subr.bf16.mxu0 0
        %626 = vmatpush1.bf16.msra.mxu0 %v609
        %627 = vmatprep.subr.bf16.mxu0 0
        %628 = vmatpush1.bf16.msra.mxu0 %v610
        %629 = vmatprep.subr.bf16.mxu0 0
        %630 = vmatpush1.bf16.msra.mxu0 %v611
        %631 = vmatprep.subr.bf16.mxu0 0
        %632 = vmatpush1.bf16.msra.mxu0 %v612
        %633 = vmatprep.subr.bf16.mxu0 0
        %634 = vmatpush1.bf16.msra.mxu0 %v613
        %635 = vmatprep.subr.bf16.mxu0 0
        %636 = vmatpush1.bf16.msra.mxu0 %v614
        %637 = vmatprep.subr.bf16.mxu0 0
        %638 = vmatpush1.bf16.msra.mxu0 %v615
        %639 = vmatprep.subr.bf16.mxu0 0
        %640 = vmatpush1.bf16.msra.mxu0 %v616
        %641 = vmatprep.subr.bf16.mxu0 0
        %642 = vmatpush1.bf16.msra.mxu0 0
        %643 = vmatprep.subr.bf16.mxu0 0
        %644 = vmatpush1.bf16.msra.mxu0 0
        %645 = vmatprep.subr.bf16.mxu0 0
        %646 = vmatpush1.bf16.msra.mxu0 0
        %647 = vmatprep.subr.bf16.mxu0 0
        %648 = vmatpush1.bf16.msra.mxu0 0
        %649 = vmatprep.subr.bf16.mxu0 0
        %650 = vmatpush1.bf16.msra.mxu0 0
        %651 = vmatprep.subr.bf16.mxu0 0
        %652 = vmatpush1.bf16.msra.mxu0 0
        %653 = vmatprep.subr.bf16.mxu0 0
        %654 = vmatpush1.bf16.msra.mxu0 0
        %655 = vmatprep.subr.bf16.mxu0 0
        %656 = vmatpush1.bf16.msra.mxu0 0
        %657 = vmatprep.mubr.bf16.mxu0 0
        %658 = vmatmul.mubr.bf16.gmra.mrb[0].mxu0 %v552
        %v659 = vpop.f32.mrb[0].mxu0
        %v660 = vadd.f32 %v575, %v659
        %v661 = vpop.f32.mrb[0].mxu0
        %v662 = vpop.f32.mrb[0].mxu0
        %v663 = vadd.f32 %v575, %v662
        %v664 = vpop.f32.mrb[0].mxu0
        %665 = vmatprep.mubr.bf16.mxu0 0
        %666 = vmatmul.mubr.bf16.gmra.mrb[0].mxu0 %v553
        %v667 = vpop.f32.mrb[0].mxu0
        %v668 = vadd.f32 %v575, %v667
        %v669 = vpop.f32.mrb[0].mxu0
        %v670 = vpop.f32.mrb[0].mxu0
        %v671 = vadd.f32 %v575, %v670
        %v672 = vpop.f32.mrb[0].mxu0
        %673 = vdwg.mxu0
        %v674 = vmax.f32 %v660, 0.0
        %v675 = vmax.f32 %v663, 0.0
        %v676 = vmax.f32 %v668, 0.0
        %v677 = vmax.f32 %v671, 0.0
        %v678 = vpack.c.bf16 %v675, %v674
        %v679 = vpack.c.bf16 %v677, %v676
        %v680 = vld [vmem:[%s4] sm:$0xf]
        %v681 = vld [vmem:[%s4 + $0x4] sm:$0xf]
        %v682 = vld [vmem:[%s4 + $0x8] sm:$0xf]
        %v683 = vld [vmem:[%s4 + $0xc] sm:$0xf]
        %v684 = vld [vmem:[%s4 + $0x10] sm:$0xf]
        %v685 = vld [vmem:[%s4 + $0x14] sm:$0xf]
        %v686 = vld [vmem:[%s4 + $0x18] sm:$0xf]
        %v687 = vld [vmem:[%s4 + $0x1c] sm:$0xf]
        %v688 = vld [vmem:[%s4 + $0x20] sm:$0xf]
        %v689 = vld [vmem:[%s4 + $0x24] sm:$0xf]
        %v690 = vld [vmem:[%s4 + $0x28] sm:$0xf]
        %v691 = vld [vmem:[%s4 + $0x2c] sm:$0xf]
        %v692 = vld [vmem:[%s4 + $0x30] sm:$0xf]
        %v693 = vld [vmem:[%s4 + $0x34] sm:$0xf]
        %v694 = vld [vmem:[%s4 + $0x38] sm:$0xf]
        %v695 = vld [vmem:[%s4 + $0x3c] sm:$0xf]
        %v696 = vld [vmem:[%s5] sm:$0x1]
        %v698 = vlaneseq
        %v699 = vshrl.u32 %v698, 7
        %v700 = vsub.s32 0, %v699
        %v701 = vrot.slane %v696, %v700
        %v719 = vunpack.c.l.b16 %v680
        %v720 = vunpack.c.l.b16 %v681
        %v721 = vunpack.c.l.b16 %v682
        %v722 = vunpack.c.l.b16 %v683
        %v723 = vunpack.c.l.b16 %v684
        %v724 = vunpack.c.l.b16 %v685
        %v725 = vunpack.c.l.b16 %v686
        %v726 = vunpack.c.l.b16 %v687
        %v727 = vunpack.c.l.b16 %v688
        %v728 = vunpack.c.l.b16 %v689
        %v729 = vunpack.c.l.b16 %v690
        %v730 = vunpack.c.l.b16 %v691
        %v731 = vunpack.c.l.b16 %v692
        %v732 = vunpack.c.l.b16 %v693
        %v733 = vunpack.c.l.b16 %v694
        %v734 = vunpack.c.l.b16 %v695
        %v735 = vpack.c.b16 %v720, %v719
        %v736 = vpack.c.b16 %v722, %v721
        %v737 = vpack.c.b16 %v724, %v723
        %v738 = vpack.c.b16 %v726, %v725
        %v739 = vpack.c.b16 %v728, %v727
        %v740 = vpack.c.b16 %v730, %v729
        %v741 = vpack.c.b16 %v732, %v731
        %v742 = vpack.c.b16 %v734, %v733
        %751 = vmatprep.subr.bf16.mxu0 0
        %752 = vmatpush1.bf16.msra.mxu0 %v735
        %753 = vmatprep.subr.bf16.mxu0 0
        %754 = vmatpush1.bf16.msra.mxu0 %v736
        %755 = vmatprep.subr.bf16.mxu0 0
        %756 = vmatpush1.bf16.msra.mxu0 %v737
        %757 = vmatprep.subr.bf16.mxu0 0
        %758 = vmatpush1.bf16.msra.mxu0 %v738
        %759 = vmatprep.subr.bf16.mxu0 0
        %760 = vmatpush1.bf16.msra.mxu0 %v739
        %761 = vmatprep.subr.bf16.mxu0 0
        %762 = vmatpush1.bf16.msra.mxu0 %v740
        %763 = vmatprep.subr.bf16.mxu0 0
        %764 = vmatpush1.bf16.msra.mxu0 %v741
        %765 = vmatprep.subr.bf16.mxu0 0
        %766 = vmatpush1.bf16.msra.mxu0 %v742
        %767 = vmatprep.subr.bf16.mxu0 0
        %768 = vmatpush1.bf16.msra.mxu0 0
        %769 = vmatprep.subr.bf16.mxu0 0
        %770 = vmatpush1.bf16.msra.mxu0 0
        %771 = vmatprep.subr.bf16.mxu0 0
        %772 = vmatpush1.bf16.msra.mxu0 0
        %773 = vmatprep.subr.bf16.mxu0 0
        %774 = vmatpush1.bf16.msra.mxu0 0
        %775 = vmatprep.subr.bf16.mxu0 0
        %776 = vmatpush1.bf16.msra.mxu0 0
        %777 = vmatprep.subr.bf16.mxu0 0
        %778 = vmatpush1.bf16.msra.mxu0 0
        %779 = vmatprep.subr.bf16.mxu0 0
        %780 = vmatpush1.bf16.msra.mxu0 0
        %781 = vmatprep.subr.bf16.mxu0 0
        %782 = vmatpush1.bf16.msra.mxu0 0
        %783 = vmatprep.mubr.bf16.mxu0 0
        %784 = vmatmul.mubr.bf16.gmra.mrb[0].mxu0 %v678
        %v785 = vpop.f32.mrb[0].mxu0
        %v786 = vadd.f32 %v701, %v785
        %v787 = vpop.f32.mrb[0].mxu0
        %v788 = vpop.f32.mrb[0].mxu0
        %v789 = vadd.f32 %v701, %v788
        %v790 = vpop.f32.mrb[0].mxu0
        %791 = vmatprep.mubr.bf16.mxu0 0
        %792 = vmatmul.mubr.bf16.gmra.mrb[0].mxu0 %v679
        %v793 = vpop.f32.mrb[0].mxu0
        %v794 = vadd.f32 %v701, %v793
        %v795 = vpop.f32.mrb[0].mxu0
        %v796 = vpop.f32.mrb[0].mxu0
        %v797 = vadd.f32 %v701, %v796
        %v798 = vpop.f32.mrb[0].mxu0
        %799 = vdwg.mxu0
        %v800 = vpack.c.bf16 %v786, %v786
        %v801 = vpack.c.bf16 %v789, %v789
        %v802 = vpack.c.bf16 %v794, %v794
        %v803 = vpack.c.bf16 %v797, %v797
        %v805 = vsel %vm369, %v800, 0
        %807 = vmatprep.subr.bf16.mxu0 0
        %808 = vmatpush1.bf16.msra.mxu0 %v805
        %809 = vmatprep.subr.bf16.mxu0 0
        %810 = vmatpush1.bf16.msra.mxu0 0
        %811 = vmatprep.subr.bf16.mxu0 0
        %812 = vmatpush1.bf16.msra.mxu0 0
        %813 = vmatprep.subr.bf16.mxu0 0
        %814 = vmatpush1.bf16.msra.mxu0 0
        %815 = vmatprep.subr.bf16.mxu0 0
        %816 = vmatpush1.bf16.msra.mxu0 0
        %817 = vmatprep.subr.bf16.mxu0 0
        %818 = vmatpush1.bf16.msra.mxu0 0
        %819 = vmatprep.subr.bf16.mxu0 0
        %820 = vmatpush1.bf16.msra.mxu0 0
        %821 = vmatprep.subr.bf16.mxu0 0
        %822 = vmatpush1.bf16.msra.mxu0 0
        %823 = vmatprep.subr.bf16.mxu0 0
        %824 = vmatpush1.bf16.msra.mxu0 0
        %825 = vmatprep.subr.bf16.mxu0 0
        %826 = vmatpush1.bf16.msra.mxu0 0
        %827 = vmatprep.subr.bf16.mxu0 0
        %828 = vmatpush1.bf16.msra.mxu0 0
        %829 = vmatprep.subr.bf16.mxu0 0
        %830 = vmatpush1.bf16.msra.mxu0 0
        %831 = vmatprep.subr.bf16.mxu0 0
        %832 = vmatpush1.bf16.msra.mxu0 0
        %833 = vmatprep.subr.bf16.mxu0 0
        %834 = vmatpush1.bf16.msra.mxu0 0
        %835 = vmatprep.subr.bf16.mxu0 0
        %836 = vmatpush1.bf16.msra.mxu0 0
        %837 = vmatprep.subr.bf16.mxu0 0
        %838 = vmatpush1.bf16.msra.mxu0 0
        %839 = vmatprep.mubr.bf16.mxu0 0
        %840 = vmatmul.mubr.bf16.gmra.mrb[0].mxu0 %v367
        %v841 = vpop.f32.mrb[0].mxu0
        %v842 = vadd.f32 0.0, %v841
        %v843 = vpop.f32.mrb[0].mxu0
        %v844 = vpop.f32.mrb[0].mxu0
        %v845 = vpop.f32.mrb[0].mxu0
        %846 = vdwg.mxu0
        %v848 = vsel %vm369, %v801, 0
        %850 = vmatprep.subr.bf16.mxu0 0
        %851 = vmatpush1.bf16.msra.mxu0 %v848
        %852 = vmatprep.subr.bf16.mxu0 0
        %853 = vmatpush1.bf16.msra.mxu0 0
        %854 = vmatprep.subr.bf16.mxu0 0
        %855 = vmatpush1.bf16.msra.mxu0 0
        %856 = vmatprep.subr.bf16.mxu0 0
        %857 = vmatpush1.bf16.msra.mxu0 0
        %858 = vmatprep.subr.bf16.mxu0 0
        %859 = vmatpush1.bf16.msra.mxu0 0
        %860 = vmatprep.subr.bf16.mxu0 0
        %861 = vmatpush1.bf16.msra.mxu0 0
        %862 = vmatprep.subr.bf16.mxu0 0
        %863 = vmatpush1.bf16.msra.mxu0 0
        %864 = vmatprep.subr.bf16.mxu0 0
        %865 = vmatpush1.bf16.msra.mxu0 0
        %866 = vmatprep.subr.bf16.mxu0 0
        %867 = vmatpush1.bf16.msra.mxu0 0
        %868 = vmatprep.subr.bf16.mxu0 0
        %869 = vmatpush1.bf16.msra.mxu0 0
        %870 = vmatprep.subr.bf16.mxu0 0
        %871 = vmatpush1.bf16.msra.mxu0 0
        %872 = vmatprep.subr.bf16.mxu0 0
        %873 = vmatpush1.bf16.msra.mxu0 0
        %874 = vmatprep.subr.bf16.mxu0 0
        %875 = vmatpush1.bf16.msra.mxu0 0
        %876 = vmatprep.subr.bf16.mxu0 0
        %877 = vmatpush1.bf16.msra.mxu0 0
        %878 = vmatprep.subr.bf16.mxu0 0
        %879 = vmatpush1.bf16.msra.mxu0 0
        %880 = vmatprep.subr.bf16.mxu0 0
        %881 = vmatpush1.bf16.msra.mxu0 0
        %882 = vmatprep.mubr.bf16.mxu0 0
        %883 = vmatmul.mubr.bf16.gmra.mrb[0].mxu0 %v367
        %v884 = vpop.f32.mrb[0].mxu0
        %v885 = vadd.f32 0.0, %v884
        %v886 = vpop.f32.mrb[0].mxu0
        %v887 = vpop.f32.mrb[0].mxu0
        %v888 = vpop.f32.mrb[0].mxu0
        %889 = vdwg.mxu0
        %v891 = vsel %vm369, %v802, 0
        %893 = vmatprep.subr.bf16.mxu0 0
        %894 = vmatpush1.bf16.msra.mxu0 %v891
        %895 = vmatprep.subr.bf16.mxu0 0
        %896 = vmatpush1.bf16.msra.mxu0 0
        %897 = vmatprep.subr.bf16.mxu0 0
        %898 = vmatpush1.bf16.msra.mxu0 0
        %899 = vmatprep.subr.bf16.mxu0 0
        %900 = vmatpush1.bf16.msra.mxu0 0
        %901 = vmatprep.subr.bf16.mxu0 0
        %902 = vmatpush1.bf16.msra.mxu0 0
        %903 = vmatprep.subr.bf16.mxu0 0
        %904 = vmatpush1.bf16.msra.mxu0 0
        %905 = vmatprep.subr.bf16.mxu0 0
        %906 = vmatpush1.bf16.msra.mxu0 0
        %907 = vmatprep.subr.bf16.mxu0 0
        %908 = vmatpush1.bf16.msra.mxu0 0
        %909 = vmatprep.subr.bf16.mxu0 0
        %910 = vmatpush1.bf16.msra.mxu0 0
        %911 = vmatprep.subr.bf16.mxu0 0
        %912 = vmatpush1.bf16.msra.mxu0 0
        %913 = vmatprep.subr.bf16.mxu0 0
        %914 = vmatpush1.bf16.msra.mxu0 0
        %915 = vmatprep.subr.bf16.mxu0 0
        %916 = vmatpush1.bf16.msra.mxu0 0
        %917 = vmatprep.subr.bf16.mxu0 0
        %918 = vmatpush1.bf16.msra.mxu0 0
        %919 = vmatprep.subr.bf16.mxu0 0
        %920 = vmatpush1.bf16.msra.mxu0 0
        %921 = vmatprep.subr.bf16.mxu0 0
        %922 = vmatpush1.bf16.msra.mxu0 0
        %923 = vmatprep.subr.bf16.mxu0 0
        %924 = vmatpush1.bf16.msra.mxu0 0
        %925 = vmatprep.mubr.bf16.mxu0 0
        %926 = vmatmul.mubr.bf16.gmra.mrb[0].mxu0 %v367
        %v927 = vpop.f32.mrb[0].mxu0
        %v928 = vadd.f32 0.0, %v927
        %v929 = vpop.f32.mrb[0].mxu0
        %v930 = vpop.f32.mrb[0].mxu0
        %v931 = vpop.f32.mrb[0].mxu0
        %932 = vdwg.mxu0
        %v934 = vsel %vm369, %v803, 0
        %936 = vmatprep.subr.bf16.mxu0 0
        %937 = vmatpush1.bf16.msra.mxu0 %v934
        %938 = vmatprep.subr.bf16.mxu0 0
        %939 = vmatpush1.bf16.msra.mxu0 0
        %940 = vmatprep.subr.bf16.mxu0 0
        %941 = vmatpush1.bf16.msra.mxu0 0
        %942 = vmatprep.subr.bf16.mxu0 0
        %943 = vmatpush1.bf16.msra.mxu0 0
        %944 = vmatprep.subr.bf16.mxu0 0
        %945 = vmatpush1.bf16.msra.mxu0 0
        %946 = vmatprep.subr.bf16.mxu0 0
        %947 = vmatpush1.bf16.msra.mxu0 0
        %948 = vmatprep.subr.bf16.mxu0 0
        %949 = vmatpush1.bf16.msra.mxu0 0
        %950 = vmatprep.subr.bf16.mxu0 0
        %951 = vmatpush1.bf16.msra.mxu0 0
        %952 = vmatprep.subr.bf16.mxu0 0
        %953 = vmatpush1.bf16.msra.mxu0 0
        %954 = vmatprep.subr.bf16.mxu0 0
        %955 = vmatpush1.bf16.msra.mxu0 0
        %956 = vmatprep.subr.bf16.mxu0 0
        %957 = vmatpush1.bf16.msra.mxu0 0
        %958 = vmatprep.subr.bf16.mxu0 0
        %959 = vmatpush1.bf16.msra.mxu0 0
        %960 = vmatprep.subr.bf16.mxu0 0
        %961 = vmatpush1.bf16.msra.mxu0 0
        %962 = vmatprep.subr.bf16.mxu0 0
        %963 = vmatpush1.bf16.msra.mxu0 0
        %964 = vmatprep.subr.bf16.mxu0 0
        %965 = vmatpush1.bf16.msra.mxu0 0
        %966 = vmatprep.subr.bf16.mxu0 0
        %967 = vmatpush1.bf16.msra.mxu0 0
        %968 = vmatprep.mubr.bf16.mxu0 0
        %969 = vmatmul.mubr.bf16.gmra.mrb[0].mxu0 %v367
        %v970 = vpop.f32.mrb[0].mxu0
        %v971 = vadd.f32 0.0, %v970
        %v972 = vpop.f32.mrb[0].mxu0
        %v973 = vpop.f32.mrb[0].mxu0
        %v974 = vpop.f32.mrb[0].mxu0
        %975 = vdwg.mxu0
        %s976 = sld [smem:[#allocation3 + $0x1]]
        %v977 = vstv %s976
        %v978 = vmul.f32 %v977, %v786
        %v979 = vmul.f32 %v977, %v789
        %v980 = vmul.f32 %v977, %v794
        %v981 = vmul.f32 %v977, %v797
        %v982 = vadd.f32 %v978, %v842
        %v983 = vadd.f32 %v979, %v885
        %v984 = vadd.f32 %v980, %v928
        %v985 = vadd.f32 %v981, %v971
        %v986 = vpack.c.bf16 %v983, %v982
        %v987 = vpack.c.bf16 %v985, %v984
        %v988 = vld [vmem:[%s6] sm:$0xf]
        %v989 = vld [vmem:[%s6 + $0x4] sm:$0xf]
        %v990 = vld [vmem:[%s6 + $0x8] sm:$0xf]
        %v991 = vld [vmem:[%s6 + $0xc] sm:$0xf]
        %v992 = vld [vmem:[%s6 + $0x10] sm:$0xf]
        %v993 = vld [vmem:[%s6 + $0x14] sm:$0xf]
        %v994 = vld [vmem:[%s6 + $0x18] sm:$0xf]
        %v995 = vld [vmem:[%s6 + $0x1c] sm:$0xf]
        %v996 = vld [vmem:[%s6 + $0x20] sm:$0xf]
        %v997 = vld [vmem:[%s6 + $0x24] sm:$0xf]
        %v998 = vld [vmem:[%s6 + $0x28] sm:$0xf]
        %v999 = vld [vmem:[%s6 + $0x2c] sm:$0xf]
        %v1000 = vld [vmem:[%s6 + $0x30] sm:$0xf]
        %v1001 = vld [vmem:[%s6 + $0x34] sm:$0xf]
        %v1002 = vld [vmem:[%s6 + $0x38] sm:$0xf]
        %v1003 = vld [vmem:[%s6 + $0x3c] sm:$0xf]
        %v1004 = vld [vmem:[%s7] sm:$0x1]
        %v1006 = vlaneseq
        %v1007 = vshrl.u32 %v1006, 7
        %v1008 = vsub.s32 0, %v1007
        %v1009 = vrot.slane %v1004, %v1008
        %v1027 = vunpack.c.l.b16 %v988
        %v1028 = vunpack.c.l.b16 %v989
        %v1029 = vunpack.c.l.b16 %v990
        %v1030 = vunpack.c.l.b16 %v991
        %v1031 = vunpack.c.l.b16 %v992
        %v1032 = vunpack.c.l.b16 %v993
        %v1033 = vunpack.c.l.b16 %v994
        %v1034 = vunpack.c.l.b16 %v995
        %v1035 = vunpack.c.l.b16 %v996
        %v1036 = vunpack.c.l.b16 %v997
        %v1037 = vunpack.c.l.b16 %v998
        %v1038 = vunpack.c.l.b16 %v999
        %v1039 = vunpack.c.l.b16 %v1000
        %v1040 = vunpack.c.l.b16 %v1001
        %v1041 = vunpack.c.l.b16 %v1002
        %v1042 = vunpack.c.l.b16 %v1003
        %v1043 = vpack.c.b16 %v1028, %v1027
        %v1044 = vpack.c.b16 %v1030, %v1029
        %v1045 = vpack.c.b16 %v1032, %v1031
        %v1046 = vpack.c.b16 %v1034, %v1033
        %v1047 = vpack.c.b16 %v1036, %v1035
        %v1048 = vpack.c.b16 %v1038, %v1037
        %v1049 = vpack.c.b16 %v1040, %v1039
        %v1050 = vpack.c.b16 %v1042, %v1041
        %1059 = vmatprep.subr.bf16.mxu0 0
        %1060 = vmatpush1.bf16.msra.mxu0 %v1043
        %1061 = vmatprep.subr.bf16.mxu0 0
        %1062 = vmatpush1.bf16.msra.mxu0 %v1044
        %1063 = vmatprep.subr.bf16.mxu0 0
        %1064 = vmatpush1.bf16.msra.mxu0 %v1045
        %1065 = vmatprep.subr.bf16.mxu0 0
        %1066 = vmatpush1.bf16.msra.mxu0 %v1046
        %1067 = vmatprep.subr.bf16.mxu0 0
        %1068 = vmatpush1.bf16.msra.mxu0 %v1047
        %1069 = vmatprep.subr.bf16.mxu0 0
        %1070 = vmatpush1.bf16.msra.mxu0 %v1048
        %1071 = vmatprep.subr.bf16.mxu0 0
        %1072 = vmatpush1.bf16.msra.mxu0 %v1049
        %1073 = vmatprep.subr.bf16.mxu0 0
        %1074 = vmatpush1.bf16.msra.mxu0 %v1050
        %1075 = vmatprep.subr.bf16.mxu0 0
        %1076 = vmatpush1.bf16.msra.mxu0 0
        %1077 = vmatprep.subr.bf16.mxu0 0
        %1078 = vmatpush1.bf16.msra.mxu0 0
        %1079 = vmatprep.subr.bf16.mxu0 0
        %1080 = vmatpush1.bf16.msra.mxu0 0
        %1081 = vmatprep.subr.bf16.mxu0 0
        %1082 = vmatpush1.bf16.msra.mxu0 0
        %1083 = vmatprep.subr.bf16.mxu0 0
        %1084 = vmatpush1.bf16.msra.mxu0 0
        %1085 = vmatprep.subr.bf16.mxu0 0
        %1086 = vmatpush1.bf16.msra.mxu0 0
        %1087 = vmatprep.subr.bf16.mxu0 0
        %1088 = vmatpush1.bf16.msra.mxu0 0
        %1089 = vmatprep.subr.bf16.mxu0 0
        %1090 = vmatpush1.bf16.msra.mxu0 0
        %1091 = vmatprep.mubr.bf16.mxu0 0
        %1092 = vmatmul.mubr.bf16.gmra.mrb[0].mxu0 %v986
        %v1093 = vpop.f32.mrb[0].mxu0
        %v1094 = vadd.f32 %v1009, %v1093
        %v1095 = vpop.f32.mrb[0].mxu0
        %v1096 = vpop.f32.mrb[0].mxu0
        %v1097 = vadd.f32 %v1009, %v1096
        %v1098 = vpop.f32.mrb[0].mxu0
        %1099 = vmatprep.mubr.bf16.mxu0 0
        %1100 = vmatmul.mubr.bf16.gmra.mrb[0].mxu0 %v987
        %v1101 = vpop.f32.mrb[0].mxu0
        %v1102 = vadd.f32 %v1009, %v1101
        %v1103 = vpop.f32.mrb[0].mxu0
        %v1104 = vpop.f32.mrb[0].mxu0
        %v1105 = vadd.f32 %v1009, %v1104
        %v1106 = vpop.f32.mrb[0].mxu0
        %1107 = vdwg.mxu0
        %v1108 = vmax.f32 %v1094, 0.0
        %v1109 = vmax.f32 %v1097, 0.0
        %v1110 = vmax.f32 %v1102, 0.0
        %v1111 = vmax.f32 %v1105, 0.0
        %v1112 = vadd.f32 %v1108, %v1109
        %v1113 = vadd.f32 %v1112, %v1110
        %v1114 = vadd.f32 %v1113, %v1111
        %v1115 = vpack.c.bf16 %v1114, %v1114
        %v1116 = vld [vmem:[%s8] sm:$0xf]
        %v1117 = vld [vmem:[%s8 + $0x4] sm:$0xf]
        %v1118 = vld [vmem:[%s8 + $0x8] sm:$0xf]
        %v1119 = vld [vmem:[%s8 + $0xc] sm:$0xf]
        %v1120 = vld [vmem:[%s8 + $0x10] sm:$0xf]
        %v1121 = vld [vmem:[%s8 + $0x14] sm:$0xf]
        %v1122 = vld [vmem:[%s8 + $0x18] sm:$0xf]
        %v1123 = vld [vmem:[%s8 + $0x1c] sm:$0xf]
        %v1124 = vld [vmem:[%s8 + $0x20] sm:$0xf]
        %v1125 = vld [vmem:[%s8 + $0x24] sm:$0xf]
        %v1126 = vld [vmem:[%s8 + $0x28] sm:$0xf]
        %v1127 = vld [vmem:[%s8 + $0x2c] sm:$0xf]
        %v1128 = vld [vmem:[%s8 + $0x30] sm:$0xf]
        %v1129 = vld [vmem:[%s8 + $0x34] sm:$0xf]
        %v1130 = vld [vmem:[%s8 + $0x38] sm:$0xf]
        %v1131 = vld [vmem:[%s8 + $0x3c] sm:$0xf]
        %v1148 = vunpack.c.l.b16 %v1116
        %v1149 = vunpack.c.l.b16 %v1117
        %v1150 = vunpack.c.l.b16 %v1118
        %v1151 = vunpack.c.l.b16 %v1119
        %v1152 = vunpack.c.l.b16 %v1120
        %v1153 = vunpack.c.l.b16 %v1121
        %v1154 = vunpack.c.l.b16 %v1122
        %v1155 = vunpack.c.l.b16 %v1123
        %v1156 = vunpack.c.l.b16 %v1124
        %v1157 = vunpack.c.l.b16 %v1125
        %v1158 = vunpack.c.l.b16 %v1126
        %v1159 = vunpack.c.l.b16 %v1127
        %v1160 = vunpack.c.l.b16 %v1128
        %v1161 = vunpack.c.l.b16 %v1129
        %v1162 = vunpack.c.l.b16 %v1130
        %v1163 = vunpack.c.l.b16 %v1131
        %v1164 = vpack.c.b16 %v1149, %v1148
        %v1165 = vpack.c.b16 %v1151, %v1150
        %v1166 = vpack.c.b16 %v1153, %v1152
        %v1167 = vpack.c.b16 %v1155, %v1154
        %v1168 = vpack.c.b16 %v1157, %v1156
        %v1169 = vpack.c.b16 %v1159, %v1158
        %v1170 = vpack.c.b16 %v1161, %v1160
        %v1171 = vpack.c.b16 %v1163, %v1162
        %1180 = vmatprep.subr.bf16.mxu0 0
        %1181 = vmatpush1.bf16.msra.mxu0 %v1164
        %1182 = vmatprep.subr.bf16.mxu0 0
        %1183 = vmatpush1.bf16.msra.mxu0 %v1165
        %1184 = vmatprep.subr.bf16.mxu0 0
        %1185 = vmatpush1.bf16.msra.mxu0 %v1166
        %1186 = vmatprep.subr.bf16.mxu0 0
        %1187 = vmatpush1.bf16.msra.mxu0 %v1167
        %1188 = vmatprep.subr.bf16.mxu0 0
        %1189 = vmatpush1.bf16.msra.mxu0 %v1168
        %1190 = vmatprep.subr.bf16.mxu0 0
        %1191 = vmatpush1.bf16.msra.mxu0 %v1169
        %1192 = vmatprep.subr.bf16.mxu0 0
        %1193 = vmatpush1.bf16.msra.mxu0 %v1170
        %1194 = vmatprep.subr.bf16.mxu0 0
        %1195 = vmatpush1.bf16.msra.mxu0 %v1171
        %1196 = vmatprep.subr.bf16.mxu0 0
        %1197 = vmatpush1.bf16.msra.mxu0 0
        %1198 = vmatprep.subr.bf16.mxu0 0
        %1199 = vmatpush1.bf16.msra.mxu0 0
        %1200 = vmatprep.subr.bf16.mxu0 0
        %1201 = vmatpush1.bf16.msra.mxu0 0
        %1202 = vmatprep.subr.bf16.mxu0 0
        %1203 = vmatpush1.bf16.msra.mxu0 0
        %1204 = vmatprep.subr.bf16.mxu0 0
        %1205 = vmatpush1.bf16.msra.mxu0 0
        %1206 = vmatprep.subr.bf16.mxu0 0
        %1207 = vmatpush1.bf16.msra.mxu0 0
        %1208 = vmatprep.subr.bf16.mxu0 0
        %1209 = vmatpush1.bf16.msra.mxu0 0
        %1210 = vmatprep.subr.bf16.mxu0 0
        %1211 = vmatpush1.bf16.msra.mxu0 0
        %1212 = vmatprep.mubr.bf16.mxu0 0
        %1213 = vmatmul.mubr.bf16.gmra.mrb[0].mxu0 %v1115
        %v1214 = vpop.f32.mrb[0].mxu0
        %v1215 = vadd.f32 0.0, %v1214
        %v1216 = vpop.f32.mrb[0].mxu0
        %v1217 = vpop.f32.mrb[0].mxu0
        %v1218 = vpop.f32.mrb[0].mxu0
        %1219 = vdwg.mxu0
        %p1220 = scmp.eq.s32.totalorder %s29, 0
        // Predicated region
        $region61: #{gin_sample_aggregator_forward.1} parent=59 // pred_check
          %p1221 = pneg %p1220
        $region62: #{gin_sample_aggregator_forward.1} parent=59 // pred_check_branch
          %1223 = sbr.rel (%p1221) target = $region64
        $region63: #{gin_sample_aggregator_forward.1} parent=59 // pred_region
          %v1224 = vld [vmem:[%s9] sm:$0x1]
          %v1225 = vmul.f32 %v1224, 8.0
          %v1227 = vlaneseq
          %v1228 = vshrl.u32 %v1227, 7
          %v1229 = vsub.s32 0, %v1228
          %v1230 = vrot.slane %v1225, %v1229
          %1232 = vst [vmem:[#allocation4] sm:$0xff] %v1230
        $region64: #{gin_sample_aggregator_forward.1} parent=59 // pred_fallthru
          _
        %v1233 = vld [vmem:[#allocation4] sm:$0xff]
        %v1234 = vadd.f32 %v1233, %v1215
        %1235 = vst [vmem:[#allocation4] sm:$0xff] %v1234
        // Predicated region
        $region65: #{gin_sample_aggregator_forward.1} parent=59 // pred_check
          %p1236 = pneg %p257
        $region66: #{gin_sample_aggregator_forward.1} parent=59 // pred_check_branch
          %1238 = sbr.rel (%p1236) target = $region68
        $region67: #{gin_sample_aggregator_forward.1} parent=59 // pred_region
          %s1240 = ssub.s32 128, 128
          %1241 = vsyncadd [#allocation5], %s1240
          %s1243 = sshll.u32 [#allocation4], 4
          %s1244 = int_to_ptr.vmem [resolvable:$true] %s1243
          %1246 = dma.vmem_to_hbm [thread:$0]  %s1244, 128, %s11, [#allocation5]
        $region68: #{gin_sample_aggregator_forward.1} parent=59 // pred_fallthru
          _
        // Predicated region
        $region69: #{gin_sample_aggregator_forward.1} parent=59 // pred_check
          %p1247 = pneg %p257
        $region70: #{gin_sample_aggregator_forward.1} parent=59 // pred_check_branch
          %1249 = sbr.rel (%p1247) target = $region72
        $region71: #{gin_sample_aggregator_forward.1} parent=59 // pred_region
          %1250 = dma.done [#allocation5], 128
        $region72: #{gin_sample_aggregator_forward.1} parent=59 // pred_fallthru
          _
      $region60: #{gin_sample_aggregator_forward.1} parent=5 // pred_fallthru
        _
      %p1251 = scmp.le.s32.totalorder 2, %s24
      // Predicated region
      $region73: #{gin_sample_aggregator_forward.1} parent=5 // pred_check
        %p1252 = pneg %p1251
      $region74: #{gin_sample_aggregator_forward.1} parent=5 // pred_check_branch
        %1254 = sbr.rel (%p1252) target = $region76
      $region75: #{gin_sample_aggregator_forward.1} parent=5 // pred_region
        %s1255 = ssub.s32 %s24, 2
      $region76: #{gin_sample_aggregator_forward.1} parent=5 // pred_fallthru
        _
    $region6: #{gin_sample_aggregator_forward.1} parent=1 // loop_footer
      %s28 = sadd.s32 1, %s24
    $region7: #{gin_sample_aggregator_forward.1} parent=1 // loop_footer_branch
      %23 = sbr.rel target = $region3
    $region8: #{gin_sample_aggregator_forward.1} parent=1 // loop_exit
      _
    %1256 = vsyncpa [#allocation5], 1
    %s1257 = scalar_lea.sflag [#allocation5], 1
    %1258 = vsyncpa %s1257, 1

</llo_original>
